<compile_context>
chip_gen: v7x
topology: tpu7x:2x2x1
jax: 0.10.0
libtpu: 0.0.40
codegen_flags: <defaults>
</compile_context>

<pallas_src>
import functools

import jax
import jax.numpy as jnp
from jax.experimental import pallas as pl
from jax.experimental.pallas import tpu as pltpu

_MASK_FILL = -1e9          # matches torch masked_fill(-1000000000.0)
_VMEM_FRACTION = 0.75      # fraction of physical VMEM handed to the kernel


# --------------------------------------------------------------------------
# Kernels
# --------------------------------------------------------------------------
def _sdpa_weights_kernel(*refs, scale, has_mask):
    q_ref, k_ref, v_ref = refs[:3]
    idx = 3
    bias_ref = None
    if has_mask:
        bias_ref = refs[idx]
        idx += 1
    ctx_ref, attn_ref = refs[idx], refs[idx + 1]

    # Fold scale into Q (Lq*D multiplies instead of Lq*Lk); keep matmul operands
    # in the input dtype, accumulate in f32 on the MXU.
    q = q_ref[...] * scale                                     # (bb, tq, D)
    scores = jnp.einsum("bqd,bkd->bqk", q, k_ref[...],
                        preferred_element_type=jnp.float32)    # (bb, tq, Lk) f32
    if has_mask:
        scores = scores + bias_ref[...].astype(jnp.float32)    # additive bias

    # Numerically stable softmax over the full Lk axis, in f32.
    m = jnp.max(scores, axis=-1, keepdims=True)
    e = jnp.exp(scores - m)
    denom = jnp.sum(e, axis=-1, keepdims=True)
    w = e * pl.reciprocal(denom, approx=False)                 # exact: weights sum to 1

    ctx = jnp.einsum("bqk,bkd->bqd", w.astype(v_ref.dtype), v_ref[...],
                     preferred_element_type=jnp.float32)       # (bb, tq, Dv)

    ctx_ref[...] = ctx.astype(ctx_ref.dtype)
    attn_ref[...] = w.astype(attn_ref.dtype)


def _sdpa_flash_kernel(*refs, scale, has_mask, emit_stats):
    q_ref, k_ref, v_ref = refs[:3]
    idx = 3
    bias_ref = None
    if has_mask:
        bias_ref = refs[idx]
        idx += 1
    ctx_ref = refs[idx]
    idx += 1
    m_out = l_out = None
    if emit_stats:
        m_out, l_out = refs[idx], refs[idx + 1]
        idx += 2
    q_scr, m_scr, l_scr, acc_scr = refs[idx:idx + 4]

    ki = pl.program_id(2)

    @pl.when(ki == 0)
    def _init():
        # Q*scale hoisted out of the ki loop: computed once per (b, qi) block.
        q_scr[...] = q_ref[...] * scale
        m_scr[...] = jnp.full(m_scr.shape, -jnp.inf, dtype=m_scr.dtype)
        l_scr[...] = jnp.zeros(l_scr.shape, dtype=l_scr.dtype)
        acc_scr[...] = jnp.zeros(acc_scr.shape, dtype=acc_scr.dtype)

    s = jnp.einsum("bqd,bkd->bqk", q_scr[...], k_ref[...],
                   preferred_element_type=jnp.float32)          # (bb, tq, tk) f32
    if has_mask:
        s = s + bias_ref[...].astype(jnp.float32)

    m_prev = m_scr[...]
    m_new = jnp.maximum(m_prev, jnp.max(s, axis=-1, keepdims=True))
    alpha = jnp.exp(m_prev - m_new)
    p = jnp.exp(s - m_new)
    l_scr[...] = alpha * l_scr[...] + jnp.sum(p, axis=-1, keepdims=True)
    acc_scr[...] = alpha * acc_scr[...] + jnp.einsum(
        "bqk,bkd->bqd", p.astype(v_ref.dtype), v_ref[...],
        preferred_element_type=jnp.float32)
    m_scr[...] = m_new

    @pl.when(ki == pl.num_programs(2) - 1)
    def _finalize():
        l = l_scr[...]
        # Exact reciprocal when stats are emitted (weights path), approx (EUP
        # slot) for the ctx-only flash path.
        inv_l = pl.reciprocal(l, approx=not emit_stats)
        ctx_ref[...] = (acc_scr[...] * inv_l).astype(ctx_ref.dtype)
        if emit_stats:
            m_out[...] = m_scr[...]
            l_out[...] = l


def _sdpa_weights_pass2_kernel(*refs, scale, has_mask):
    q_ref, k_ref, m_ref, l_ref = refs[:4]
    idx = 4
    bias_ref = None
    if has_mask:
        bias_ref = refs[idx]
        idx += 1
    attn_ref = refs[idx]

    q = q_ref[...] * scale
    s = jnp.einsum("bqd,bkd->bqk", q, k_ref[...],
                   preferred_element_type=jnp.float32)
    if has_mask:
        s = s + bias_ref[...].astype(jnp.float32)
    w = jnp.exp(s - m_ref[...]) * pl.reciprocal(l_ref[...], approx=False)
    attn_ref[...] = w.astype(attn_ref.dtype)


# --------------------------------------------------------------------------
# Tiling / VMEM heuristics
# --------------------------------------------------------------------------
def _vmem_capacity_bytes():
    try:
        info = pltpu.get_tpu_info()
        cap = getattr(info, "vmem_capacity_bytes", None)
        if cap:
            return int(cap)
    except Exception:
        pass
    return 64 * 1024 * 1024   # conservative default (v7x per-core VMEM)


def _seq_tile_candidates(length, vmem_cap):
    # Prefer 256 first on small-VMEM parts (v7x), 512 first on 128-MiB parts.
    pref = (256, 512, 128) if vmem_cap < (100 << 20) else (512, 256, 128)
    cands = [t for t in pref if t <= length and length % t == 0]
    if not cands:
        cands = [length]      # tiny / non-multiple axis: single full block
    return cands


def _batch_block_candidates(B, Lq, tq):
    # For small-Lq (decode-like) shapes, batch several heads per grid step to
    # amortize the ~0.35 us per-step overhead.  Keep >= 2 total parallel grid
    # steps when possible so both v7x TensorCores get work (relaxed: counts
    # batch *and* q-tile parallel steps).
    if Lq > 64:
        return [1]
    n_q = max(Lq // tq, 1)
    prefs = [bb for bb in (8, 4, 2) if B % bb == 0]
    ok = [bb for bb in prefs if (B // bb) * n_q >= 2]
    prefs = (ok if ok else prefs) + [1]
    out = []
    for bb in prefs:
        if bb not in out:
            out.append(bb)
    return out


def _weights_footprint(bb, tq, Lk, D, Dv, in_bytes, out_bytes, has_mask, bias_bb):
    kv = 2 * bb * Lk * (D + Dv) * in_bytes          # double-buffered resident K/V
    qb = 2 * bb * tq * D * in_bytes                 # double-buffered Q block
    outs = 2 * bb * tq * (Dv + Lk) * out_bytes      # ctx + attn output blocks
    bias = (2 * bias_bb * tq * Lk * 2) if has_mask else 0
    temps = bb * tq * Lk * 12 + bb * tq * (D + Dv) * 4   # f32 scores/exp/weights
    return kv + qb + outs + bias + temps


def _flash_footprint(bb, tq, tk, D, Dv, in_bytes, out_bytes, has_mask, bias_bb,
                     emit_stats):
    ins = 2 * bb * (tq * D + tk * D + tk * Dv) * in_bytes
    outs = 2 * bb * tq * Dv * out_bytes + (16 * bb * tq if emit_stats else 0)
    bias = (2 * bias_bb * tq * tk * 2) if has_mask else 0
    scratch = bb * tq * (D * in_bytes + (Dv + 2) * 4)
    temps = bb * tq * tk * 12
    return ins + outs + bias + scratch + temps


def _choose_weights_tiling(B, Lq, Lk, D, Dv, in_bytes, out_bytes, has_mask,
                           bias_B, budget, cap):
    # Shrink the batch block before the q tile; return None if nothing fits
    # (caller falls back to the two-pass scheme).
    for tq in _seq_tile_candidates(Lq, cap):
        for bb in _batch_block_candidates(B, Lq, tq):
            bias_bb = 1 if bias_B == 1 else bb
            if _weights_footprint(bb, tq, Lk, D, Dv, in_bytes, out_bytes,
                                  has_mask, bias_bb) <= budget:
                return bb, tq
    return None


def _prepare_bias(attention_mask, lead, B, Lq, Lk):
    """Additive bf16 bias: 0 where attendable, -1e9 where mask == 0.

    Keeps the bias at batch size 1 when the mask is shared across all leading
    (batch/head) dims, so the kernel never DMAs a B-fold replicated mask.
    """
    m = jnp.asarray(attention_mask)
    bias = jnp.where(m == 0, _MASK_FILL, 0.0).astype(jnp.bfloat16)
    full_rank = len(lead) + 2
    if bias.ndim < full_rank:
        bias = bias.reshape((1,) * (full_rank - bias.ndim) + bias.shape)
    shared = all(int(d) == 1 for d in bias.shape[:-2])
    if shared:
        bias = jnp.broadcast_to(bias, (*bias.shape[:-2], Lq, Lk)).reshape(1, Lq, Lk)
        return bias, 1
    bias = jnp.broadcast_to(bias, (*lead, Lq, Lk)).reshape(B, Lq, Lk)
    return bias, B


# --------------------------------------------------------------------------
# pallas_call wrappers
# --------------------------------------------------------------------------
def _run_weights(q3, k3, v3, bias3, bias_B, scale, has_mask, bb, tq, budget):
    B, Lq, D = q3.shape
    _, Lk, Dk = k3.shape
    Dv = v3.shape[-1]

    in_specs = [
        pl.BlockSpec((bb, tq, D), lambda b, qi: (b, qi, 0)),
        pl.BlockSpec((bb, Lk, Dk), lambda b, qi: (b, 0, 0)),    # resident across qi
        pl.BlockSpec((bb, Lk, Dv), lambda b, qi: (b, 0, 0)),    # resident across qi
    ]
    args = [q3, k3, v3]
    if has_mask:
        if bias_B == 1:     # shared mask: broadcast via index_map, batch block 1
            in_specs.append(pl.BlockSpec((1, tq, Lk), lambda b, qi: (0, qi, 0)))
        else:
            in_specs.append(pl.BlockSpec((bb, tq, Lk), lambda b, qi: (b, qi, 0)))
        args.append(bias3)
    out_specs = [
        pl.BlockSpec((bb, tq, Dv), lambda b, qi: (b, qi, 0)),
        pl.BlockSpec((bb, tq, Lk), lambda b, qi: (b, qi, 0)),   # lane-dense Lk last
    ]
    kernel = functools.partial(_sdpa_weights_kernel, scale=scale, has_mask=has_mask)
    return pl.pallas_call(
        kernel,
        out_shape=(jax.ShapeDtypeStruct((B, Lq, Dv), q3.dtype),
                   jax.ShapeDtypeStruct((B, Lq, Lk), q3.dtype)),
        grid_spec=pltpu.PrefetchScalarGridSpec(
            num_scalar_prefetch=0,
            grid=(B // bb, Lq // tq),
            in_specs=in_specs,
            out_specs=out_specs,
        ),
        compiler_params=pltpu.CompilerParams(
            dimension_semantics=("parallel", "parallel"),
            vmem_limit_bytes=budget,
        ),
    )(*args)


def _run_flash(q3, k3, v3, bias3, bias_B, scale, has_mask, emit_stats,
               budget, cap):
    B, Lq, D = q3.shape
    _, Lk, Dk = k3.shape
    Dv = v3.shape[-1]
    in_bytes = q3.dtype.itemsize
    out_bytes = in_bytes

    tq_cands = _seq_tile_candidates(Lq, cap)
    tk_cands = _seq_tile_candidates(Lk, cap)
    combos = [(bbc, tqc, tkc)
              for tqc in tq_cands for tkc in tk_cands
              for bbc in _batch_block_candidates(B, Lq, tqc)]
    bb, tq, tk = combos[-1]                       # most conservative fallback
    for bbc, tqc, tkc in combos:
        bias_bb = 1 if bias_B == 1 else bbc
        if _flash_footprint(bbc, tqc, tkc, D, Dv, in_bytes, out_bytes,
                            has_mask, bias_bb, emit_stats) <= budget:
            bb, tq, tk = bbc, tqc, tkc
            break

    in_specs = [
        pl.BlockSpec((bb, tq, D), lambda b, qi, ki: (b, qi, 0)),
        pl.BlockSpec((bb, tk, Dk), lambda b, qi, ki: (b, ki, 0)),
        pl.BlockSpec((bb, tk, Dv), lambda b, qi, ki: (b, ki, 0)),
    ]
    args = [q3, k3, v3]
    if has_mask:
        if bias_B == 1:
            in_specs.append(pl.BlockSpec((1, tq, tk), lambda b, qi, ki: (0, qi, ki)))
        else:
            in_specs.append(pl.BlockSpec((bb, tq, tk), lambda b, qi, ki: (b, qi, ki)))
        args.append(bias3)

    ctx_sds = jax.ShapeDtypeStruct((B, Lq, Dv), q3.dtype)
    ctx_spec = pl.BlockSpec((bb, tq, Dv), lambda b, qi, ki: (b, qi, 0))
    if emit_stats:
        out_shape = (ctx_sds,
                     jax.ShapeDtypeStruct((B, Lq, 1), jnp.float32),
                     jax.ShapeDtypeStruct((B, Lq, 1), jnp.float32))
        out_specs = [ctx_spec,
                     pl.BlockSpec((bb, tq, 1), lambda b, qi, ki: (b, qi, 0)),
                     pl.BlockSpec((bb, tq, 1), lambda b, qi, ki: (b, qi, 0))]
    else:
        out_shape = ctx_sds
        out_specs = ctx_spec

    kernel = functools.partial(_sdpa_flash_kernel, scale=scale,
                               has_mask=has_mask, emit_stats=emit_stats)
    return pl.pallas_call(
        kernel,
        out_shape=out_shape,
        grid_spec=pltpu.PrefetchScalarGridSpec(
            num_scalar_prefetch=0,
            grid=(B // bb, Lq // tq, Lk // tk),
            in_specs=in_specs,
            out_specs=out_specs,
            scratch_shapes=[
                pltpu.VMEM((bb, tq, D), q3.dtype),      # scaled-Q (hoisted)
                pltpu.VMEM((bb, tq, 1), jnp.float32),   # running max m
                pltpu.VMEM((bb, tq, 1), jnp.float32),   # running sum l
                pltpu.VMEM((bb, tq, Dv), jnp.float32),  # output accumulator
            ],
        ),
        compiler_params=pltpu.CompilerParams(
            dimension_semantics=("parallel", "parallel", "arbitrary"),
            vmem_limit_bytes=budget,
        ),
    )(*args)


def _run_weights_pass2(q3, k3, m_stat, l_stat, bias3, bias_B, scale, has_mask,
                       budget, cap):
    B, Lq, D = q3.shape
    _, Lk, Dk = k3.shape
    in_bytes = q3.dtype.itemsize

    tq_cands = _seq_tile_candidates(Lq, cap)
    tk_cands = _seq_tile_candidates(Lk, cap)
    combos = [(bbc, tqc, tkc)
              for tqc in tq_cands for tkc in tk_cands
              for bbc in _batch_block_candidates(B, Lq, tqc)]
    bb, tq, tk = combos[-1]
    for bbc, tqc, tkc in combos:
        bias_bb = 1 if bias_B == 1 else bbc
        fp = (2 * bbc * (tqc * D + tkc * Dk) * in_bytes        # Q, K blocks
              + 2 * bbc * tqc * 2 * 4                          # m, l blocks
              + (2 * bias_bb * tqc * tkc * 2 if has_mask else 0)
              + 2 * bbc * tqc * tkc * in_bytes                 # attn output block
              + bbc * tqc * tkc * 12)                          # f32 temps
        if fp <= budget:
            bb, tq, tk = bbc, tqc, tkc
            break

    in_specs = [
        pl.BlockSpec((bb, tq, D), lambda b, qi, ki: (b, qi, 0)),
        pl.BlockSpec((bb, tk, Dk), lambda b, qi, ki: (b, ki, 0)),
        pl.BlockSpec((bb, tq, 1), lambda b, qi, ki: (b, qi, 0)),
        pl.BlockSpec((bb, tq, 1), lambda b, qi, ki: (b, qi, 0)),
    ]
    args = [q3, k3, m_stat, l_stat]
    if has_mask:
        if bias_B == 1:
            in_specs.append(pl.BlockSpec((1, tq, tk), lambda b, qi, ki: (0, qi, ki)))
        else:
            in_specs.append(pl.BlockSpec((bb, tq, tk), lambda b, qi, ki: (b, qi, ki)))
        args.append(bias3)

    kernel = functools.partial(_sdpa_weights_pass2_kernel, scale=scale,
                               has_mask=has_mask)
    return pl.pallas_call(
        kernel,
        out_shape=jax.ShapeDtypeStruct((B, Lq, Lk), q3.dtype),
        grid_spec=pltpu.PrefetchScalarGridSpec(
            num_scalar_prefetch=0,
            grid=(B // bb, Lq // tq, Lk // tk),
            in_specs=in_specs,
            out_specs=pl.BlockSpec((bb, tq, tk), lambda b, qi, ki: (b, qi, ki)),
        ),
        compiler_params=pltpu.CompilerParams(
            dimension_semantics=("parallel", "parallel", "parallel"),
            vmem_limit_bytes=budget,
        ),
    )(*args)


# --------------------------------------------------------------------------
# Public entry point (mirrors ScaledDotProductAttention.forward)
# --------------------------------------------------------------------------
def scaled_dot_product_attention(Q, K, V, scale=None, attention_mask=None,
                                 return_weights=True, _force_two_pass=False):
    """Pallas port of ScaledDotProductAttention.forward.

    Q: (..., Lq, D), K: (..., Lk, D), V: (..., Lk, Dv).
    attention_mask: optional, broadcastable to (..., Lq, Lk); positions where
    mask == 0 receive an additive -1e9 bias before softmax (torch masked_fill).
    Returns (context, attention_weights) when return_weights=True (module
    semantics); with return_weights=False returns only context via a
    flash-style kernel that never materializes the Lq x Lk weights.
    """
    *lead, Lq, D = Q.shape
    Lk, Dk = K.shape[-2], K.shape[-1]
    Dv = V.shape[-1]
    if scale is None:
        scale = float(Dk) ** (-0.5)
    scale = float(scale)

    B = 1
    for d in lead:
        B *= d
    q3 = Q.reshape(B, Lq, D)
    k3 = K.reshape(B, Lk, Dk)
    v3 = V.reshape(B, Lk, Dv)

    has_mask = attention_mask is not None
    bias3, bias_B = None, 0
    if has_mask:
        bias3, bias_B = _prepare_bias(attention_mask, lead, B, Lq, Lk)

    cap = _vmem_capacity_bytes()
    budget = int(cap * _VMEM_FRACTION)
    in_bytes = q3.dtype.itemsize
    out_bytes = in_bytes

    if return_weights:
        tiling = None
        if not _force_two_pass:
            tiling = _choose_weights_tiling(B, Lq, Lk, D, Dv, in_bytes, out_bytes,
                                            has_mask, bias_B, budget, cap)
        if tiling is None:
            # Long-Lk fallback (or forced): flash pass for ctx + (m, l) stats,
            # then a tiled normalization pass for the weights.
            ctx3, m_stat, l_stat = _run_flash(q3, k3, v3, bias3, bias_B, scale,
                                              has_mask, True, budget, cap)
            attn3 = _run_weights_pass2(q3, k3, m_stat, l_stat, bias3, bias_B,
                                       scale, has_mask, budget, cap)
        else:
            bb, tq = tiling
            ctx3, attn3 = _run_weights(q3, k3, v3, bias3, bias_B, scale,
                                       has_mask, bb, tq, budget)
        return ctx3.reshape(*lead, Lq, Dv), attn3.reshape(*lead, Lq, Lk)

    ctx3 = _run_flash(q3, k3, v3, bias3, bias_B, scale, has_mask, False,
                      budget, cap)
    return ctx3.reshape(*lead, Lq, Dv)


# --------------------------------------------------------------------------
# Reference + self-test
# --------------------------------------------------------------------------
def _reference(Q, K, V, scale=None, attention_mask=None):
    if scale is None:
        scale = K.shape[-1] ** (-0.5)
    scores = jnp.einsum("...qd,...kd->...qk", Q, K) * scale
    if attention_mask is not None:
        scores = jnp.where(attention_mask == 0, _MASK_FILL, scores)
    weights = jax.nn.softmax(scores, axis=-1)
    ctx = jnp.einsum("...qk,...kd->...qd", weights, V)
    return ctx, weights


if __name__ == "__main__":
    key = jax.random.PRNGKey(0)
    kq, kk, kv, km = jax.random.split(key, 4)

    # Small shapes: batch=2, heads=2, seq=8, hidden=32.
    B, H, L, D = 2, 2, 8, 32
    Q = jax.random.normal(kq, (B, H, L, D), dtype=jnp.float32)
    K = jax.random.normal(kk, (B, H, L, D), dtype=jnp.float32)
    V = jax.random.normal(kv, (B, H, L, D), dtype=jnp.float32)

    ref_ctx, ref_attn = _reference(Q, K, V)

    # --- full module semantics: (context, attention_weights), mask=None ---
    ctx, attn = scaled_dot_product_attention(Q, K, V)
    jax.block_until_ready(ctx)
    jax.block_until_ready(attn)
    assert ctx.shape == (B, H, L, D)
    assert attn.shape == (B, H, L, L)
    assert jnp.allclose(ctx, ref_ctx, atol=1e-5, rtol=1e-5)
    assert jnp.allclose(attn, ref_attn, atol=1e-5, rtol=1e-5)

    # --- per-(batch,head) attention_mask (masked_fill(mask == 0, -1e9)) ---
    mask = (jax.random.uniform(km, (B, H, L, L)) > 0.3).astype(jnp.int32)
    eye = jnp.eye(L, dtype=jnp.int32)[None, None]
    mask = jnp.maximum(mask, eye)   # keep diagonal unmasked so no row is empty
    ref_ctx_m, ref_attn_m = _reference(Q, K, V, attention_mask=mask)
    ctx_m, attn_m = scaled_dot_product_attention(Q, K, V, attention_mask=mask)
    jax.block_until_ready(ctx_m)
    assert jnp.allclose(ctx_m, ref_ctx_m, atol=1e-5, rtol=1e-5)
    assert jnp.allclose(attn_m, ref_attn_m, atol=1e-5, rtol=1e-5)

    # --- shared (broadcast) mask: exercises the batch-size-1 bias BlockSpec ---
    mask_s = mask[0, 0]
    ref_ctx_s, ref_attn_s = _reference(Q, K, V, attention_mask=mask_s)
    ctx_s, attn_s = scaled_dot_product_attention(Q, K, V, attention_mask=mask_s)
    jax.block_until_ready(ctx_s)
    assert jnp.allclose(ctx_s, ref_ctx_s, atol=1e-5, rtol=1e-5)
    assert jnp.allclose(attn_s, ref_attn_s, atol=1e-5, rtol=1e-5)

    # --- long-Lk two-pass fallback (forced at small shapes for coverage) ---
    ctx_tp, attn_tp = scaled_dot_product_attention(Q, K, V, attention_mask=mask,
                                                   _force_two_pass=True)
    jax.block_until_ready(ctx_tp)
    assert jnp.allclose(ctx_tp, ref_ctx_m, atol=1e-5, rtol=1e-5)
    assert jnp.allclose(attn_tp, ref_attn_m, atol=1e-5, rtol=1e-5)

    # --- flash (ctx-only) path: weights never materialized in HBM ---
    ctx_f = scaled_dot_product_attention(Q, K, V, return_weights=False)
    jax.block_until_ready(ctx_f)
    assert jnp.allclose(ctx_f, ref_ctx, atol=2e-3, rtol=2e-3)   # approx reciprocal

    ctx_fm = scaled_dot_product_attention(Q, K, V, attention_mask=mask,
                                          return_weights=False)
    jax.block_until_ready(ctx_fm)
    assert jnp.allclose(ctx_fm, ref_ctx_m, atol=2e-3, rtol=2e-3)

    print("KERNEL_OK")
</pallas_src>

<mosaic_0001>
module attributes {stable_mosaic.version = 11 : i64} {
  func.func @_sdpa_weights_kernel(%arg0: i32, %arg1: i32, %arg2: memref<2x8x32xf32, #tpu.memory_space<vmem>>, %arg3: memref<2x8x32xf32, #tpu.memory_space<vmem>>, %arg4: memref<2x8x32xf32, #tpu.memory_space<vmem>>, %arg5: memref<2x8x32xf32, #tpu.memory_space<vmem>>, %arg6: memref<2x8x8xf32, #tpu.memory_space<vmem>>) attributes {dimension_semantics = [#tpu.dimension_semantics<parallel>, #tpu.dimension_semantics<parallel>], iteration_bounds = array<i64: 2, 1>, scalar_prefetch = 0 : i64, scratch_operands = 0 : i64, tpu.core_type = #tpu.core_type<tc>, window_params = [{transform_indices = @transform_0, window_bounds = array<i64: 2, 8, 32>}, {transform_indices = @transform_1, window_bounds = array<i64: 2, 8, 32>}, {transform_indices = @transform_2, window_bounds = array<i64: 2, 8, 32>}, {transform_indices = @transform_3, window_bounds = array<i64: 2, 8, 32>}, {transform_indices = @transform_4, window_bounds = array<i64: 2, 8, 8>}]} {
    %c0 = arith.constant 0 : index
    %c0_0 = arith.constant 0 : index
    %c0_1 = arith.constant 0 : index
    %0 = vector.load %arg2[%c0, %c0_0, %c0_1] : memref<2x8x32xf32, #tpu.memory_space<vmem>>, vector<2x8x32xf32>
    %cst = arith.constant 0.176776692 : f32
    %1 = vector.broadcast %cst : f32 to vector<2x8x32xf32>
    %2 = arith.mulf %0, %1 : vector<2x8x32xf32>
    %c0_2 = arith.constant 0 : index
    %c0_3 = arith.constant 0 : index
    %c0_4 = arith.constant 0 : index
    %3 = vector.load %arg3[%c0_2, %c0_3, %c0_4] : memref<2x8x32xf32, #tpu.memory_space<vmem>>, vector<2x8x32xf32>
    "tpu.trace_start"() <{level = 10 : i32, message = "bqd,bkd->bqk"}> : () -> ()
    %cst_5 = arith.constant dense<0.000000e+00> : vector<2x8x8xf32>
    %4 = tpu.matmul %2, %3, %cst_5 {dimension_numbers = #tpu.dot_dimension_numbers<[2], [2], [1], [1], [0, 0, 0, 1, 1, 1], [0], [0]>} : vector<2x8x32xf32>, vector<2x8x32xf32>, vector<2x8x8xf32> -> vector<2x8x8xf32>
    "tpu.trace_stop"() : () -> ()
    %cst_6 = arith.constant dense<0xFF800000> : vector<2x8xf32>
    %5 = vector.multi_reduction <maximumf>, %4, %cst_6 [2] : vector<2x8x8xf32> to vector<2x8xf32>
    %6 = vector.shape_cast %5 : vector<2x8xf32> to vector<2x8x1xf32>
    %7 = vector.broadcast %6 : vector<2x8x1xf32> to vector<2x8x8xf32>
    %8 = arith.subf %4, %7 : vector<2x8x8xf32>
    %9 = math.exp %8 : vector<2x8x8xf32>
    %cst_7 = arith.constant dense<0.000000e+00> : vector<2x8xf32>
    %10 = vector.multi_reduction <add>, %9, %cst_7 [2] : vector<2x8x8xf32> to vector<2x8xf32>
    %11 = vector.shape_cast %10 : vector<2x8xf32> to vector<2x8x1xf32>
    %12 = tpu.reciprocal %11 : vector<2x8x1xf32> -> vector<2x8x1xf32>
    %13 = vector.broadcast %12 : vector<2x8x1xf32> to vector<2x8x8xf32>
    %14 = arith.mulf %9, %13 : vector<2x8x8xf32>
    %c0_8 = arith.constant 0 : index
    %c0_9 = arith.constant 0 : index
    %c0_10 = arith.constant 0 : index
    %15 = vector.load %arg4[%c0_8, %c0_9, %c0_10] : memref<2x8x32xf32, #tpu.memory_space<vmem>>, vector<2x8x32xf32>
    "tpu.trace_start"() <{level = 10 : i32, message = "bqk,bkd->bqd"}> : () -> ()
    %cst_11 = arith.constant dense<0.000000e+00> : vector<2x8x32xf32>
    %16 = tpu.matmul %14, %15, %cst_11 {dimension_numbers = #tpu.dot_dimension_numbers<[2], [1], [1], [2], [0, 0, 0, 1, 1, 2], [0], [0]>} : vector<2x8x8xf32>, vector<2x8x32xf32>, vector<2x8x32xf32> -> vector<2x8x32xf32>
    "tpu.trace_stop"() : () -> ()
    %c0_12 = arith.constant 0 : index
    %c0_13 = arith.constant 0 : index
    %c0_14 = arith.constant 0 : index
    %17 = vector.load %arg5[%c0_12, %c0_13, %c0_14] : memref<2x8x32xf32, #tpu.memory_space<vmem>>, vector<2x8x32xf32>
    tpu.vector_store %arg5[%c0_12, %c0_13, %c0_14], %16 {strides = array<i32>} : memref<2x8x32xf32, #tpu.memory_space<vmem>>, vector<2x8x32xf32>,
    %c0_15 = arith.constant 0 : index
    %c0_16 = arith.constant 0 : index
    %c0_17 = arith.constant 0 : index
    %18 = vector.load %arg6[%c0_15, %c0_16, %c0_17] : memref<2x8x8xf32, #tpu.memory_space<vmem>>, vector<2x8x8xf32>
    tpu.vector_store %arg6[%c0_15, %c0_16, %c0_17], %14 {strides = array<i32>} : memref<2x8x8xf32, #tpu.memory_space<vmem>>, vector<2x8x8xf32>,
    return
  }
  func.func @transform_0(%arg0: i32, %arg1: i32) -> (i32, i32, i32) {
    %c0_i32 = arith.constant 0 : i32
    %c0_i32_0 = arith.constant 0 : i32
    return %arg0, %arg1, %c0_i32 : i32, i32, i32
  }
  func.func @transform_1(%arg0: i32, %arg1: i32) -> (i32, i32, i32) {
    %c0_i32 = arith.constant 0 : i32
    %c0_i32_0 = arith.constant 0 : i32
    %c0_i32_1 = arith.constant 0 : i32
    return %arg0, %c0_i32, %c0_i32_0 : i32, i32, i32
  }
  func.func @transform_2(%arg0: i32, %arg1: i32) -> (i32, i32, i32) {
    %c0_i32 = arith.constant 0 : i32
    %c0_i32_0 = arith.constant 0 : i32
    %c0_i32_1 = arith.constant 0 : i32
    return %arg0, %c0_i32, %c0_i32_0 : i32, i32, i32
  }
  func.func @transform_3(%arg0: i32, %arg1: i32) -> (i32, i32, i32) {
    %c0_i32 = arith.constant 0 : i32
    %c0_i32_0 = arith.constant 0 : i32
    return %arg0, %arg1, %c0_i32 : i32, i32, i32
  }
  func.func @transform_4(%arg0: i32, %arg1: i32) -> (i32, i32, i32) {
    %c0_i32 = arith.constant 0 : i32
    %c0_i32_0 = arith.constant 0 : i32
    return %arg0, %arg1, %c0_i32 : i32, i32, i32
  }
}

</mosaic_0001>

<llo_original>
// kernel: tpu_custom_call.1
$region0: #{tpu_custom_call.1}
  #allocation0 [shape = 'u32[]', space=smem, size = 0x4, offset = 0x4, fixed_abs, tag = 'smem constant byte address 0x4 - core index']
  #allocation1 [shape = 'u32[144,128]{1,0:T(1,128)}', space=vmem, size = 0x12000, scoped, tag = 'internal scratch']
  %s0 = inlined_call_operand.hbm [shape: f32[4,8,32], index: 0, kind: input, shape index: {}]
  %s1 = inlined_call_operand.hbm [shape: f32[4,8,32], index: 1, kind: input, shape index: {}]
  %s2 = inlined_call_operand.hbm [shape: f32[4,8,32], index: 2, kind: input, shape index: {}]
  %s3 = inlined_call_operand.hbm [shape: f32[4,8,32], index: 3, kind: output, shape index: {0}]
  %s4 = inlined_call_operand.hbm [shape: f32[4,8,8], index: 4, kind: output, shape index: {1}]
  %5 = xla_tuple %s3, %s4
  %s6 = sld [smem:[#allocation0]]
  $region65: #{tpu_custom_call.1} parent=0
    _
  %s8 = ssub.s32 1, %s6
  %s9 = scalar_select 0, %s8, %s6
  $region1: #{tpu_custom_call.1} parent=0
    #allocation2 [shape = 'u8[16384]{0}', space=vmem, size = 0x4000, scoped, tag = 'input window, operand 0']
    #allocation3 [shape = 's32[2]{0}', space=sflag, size = 0x8, scoped, tag = 'scoped memory for tpu_custom_call.1']
    #allocation4 [shape = 's32[2]{0}', space=sflag, size = 0x8, scoped, tag = 'scoped memory for tpu_custom_call.1']
    #allocation5 [shape = 'u8[16384]{0}', space=vmem, size = 0x4000, scoped, tag = 'input window, operand 1']
    #allocation6 [shape = 's32[2]{0}', space=sflag, size = 0x8, scoped, tag = 'scoped memory for tpu_custom_call.1']
    #allocation7 [shape = 'u8[16384]{0}', space=vmem, size = 0x4000, scoped, tag = 'input window, operand 2']
    #allocation8 [shape = 'u8[16384]{0}', space=vmem, size = 0x4000, scoped, tag = 'output window, operand 0']
    #allocation9 [shape = 'u8[16384]{0}', space=vmem, size = 0x4000, scoped, tag = 'output window, operand 1']
    #allocation10 [shape = 's32[2]{0}', space=sflag, size = 0x8, scoped, tag = 'scoped memory for tpu_custom_call.1']
    %10 = vsyncpa [#allocation3], 0
    %s11 = scalar_lea.sflag [#allocation3], 1
    %12 = vsyncpa %s11, 0
    %13 = vsyncpa [#allocation6], 0
    %s14 = scalar_lea.sflag [#allocation6], 1
    %15 = vsyncpa %s14, 0
    %16 = vsyncpa [#allocation4], 0
    %s17 = scalar_lea.sflag [#allocation4], 1
    %18 = vsyncpa %s17, 0
    %19 = vsyncpa [#allocation10], 0
    %s20 = scalar_lea.sflag [#allocation10], 1
    %21 = vsyncpa %s20, 0
    loop: start=0, step=1, limit=4
    $region2: #{tpu_custom_call.1} parent=1 // loop_pre_header
      _
    $region3: #{tpu_custom_call.1} parent=1 // loop_header
      %s23 = sphi 0, %s27
      %p24 = scmp.ge.s32.totalorder %s23, 4
      %s30 = sphi 0, %s42
      %s31 = sphi 0, %s38
      %s32 = sphi 0, %s30
      %s33 = sphi 0, %s31
      %s34 = sphi 0, %s32
      %s35 = sphi 0, %s33
      %s47 = sphi 0, %s49
      %s50 = sphi 0, %s47
      %s51 = sphi 0, %s50
      %s67 = sphi 0, %s51
      %s73 = sphi 0, %s75
      %s76 = sphi 0, %s73
      %s77 = sphi 0, %s76
      %s93 = sphi 0, %s77
      %s99 = sphi 0, %s101
      %s102 = sphi 0, %s99
      %s103 = sphi 0, %s102
      %s119 = sphi 0, %s103
      %s127 = sphi 0, %s129
      %s130 = sphi 0, %s127
      %s131 = sphi 0, %s130
      %s147 = sphi 0, %s131
      %s155 = sphi 0, %s157
      %s158 = sphi 0, %s155
      %s159 = sphi 0, %s158
      %s175 = sphi 0, %s159
    $region4: #{tpu_custom_call.1} parent=1 // loop_header_branch
      %26 = sbr.rel (%p24) target = $region8
    $region5: #{tpu_custom_call.1} parent=1 // loop_body
      %s28 = ssub.s32 %s23, 1
      %s29 = ssub.s32 %s23, 2
      %s36 = sadd.s32 1, %s31
      %p37 = scmp.ge.s32.totalorder %s36, 1
      %s38 = scalar_select %p37, 0, %s36
      %s39 = sadd.s32 1, %s30
      %s40 = scalar_select %p37, %s39, %s30
      %p41 = scmp.ge.s32.totalorder %s40, 2
      %s42 = scalar_select %p41, 0, %s40
      %s43 = ssub.s32 %s30, %s42
      %s44 = ssub.s32 %s31, %s38
      %s45 = sor.u32 %s43, %s44
      %p46 = scmp.eq.s32.totalorder %s45, 0
      %s48 = sadd.s32 %s47, 1
      %s49 = scalar_select %p46, %s47, %s48
      %p52 = pneg %p46
      %p53 = scmp.eq.s32.totalorder %s23, 1
      %p54 = por %p52, %p53
      %p55 = scmp.ne.s32.totalorder %s47, %s50
      %p56 = scmp.eq.s32.totalorder %s23, 0
      %p57 = por %p55, %p56
      %p58 = scmp.ne.s32.totalorder %s47, %s50
      %p59 = scmp.eq.s32.totalorder %s28, 1
      %p60 = por %p58, %p59
      %p61 = scmp.ne.s32.totalorder %s50, %s51
      %p62 = scmp.eq.s32.totalorder %s28, 0
      %p63 = por %p61, %p62
      %p64 = scmp.ne.s32.totalorder %s50, %s51
      %p65 = scmp.eq.s32.totalorder %s29, 1
      %p66 = por %p64, %p65
      %p68 = scmp.ne.s32.totalorder %s51, %s67
      %p69 = scmp.eq.s32.totalorder %s29, 0
      %p70 = por %p68, %p69
      %s71 = ssub.s32 %s30, %s42
      %p72 = scmp.eq.s32.totalorder %s71, 0
      %s74 = sadd.s32 %s73, 1
      %s75 = scalar_select %p72, %s73, %s74
      %p78 = pneg %p72
      %p79 = scmp.eq.s32.totalorder %s23, 1
      %p80 = por %p78, %p79
      %p81 = scmp.ne.s32.totalorder %s73, %s76
      %p82 = scmp.eq.s32.totalorder %s23, 0
      %p83 = por %p81, %p82
      %p84 = scmp.ne.s32.totalorder %s73, %s76
      %p85 = scmp.eq.s32.totalorder %s28, 1
      %p86 = por %p84, %p85
      %p87 = scmp.ne.s32.totalorder %s76, %s77
      %p88 = scmp.eq.s32.totalorder %s28, 0
      %p89 = por %p87, %p88
      %p90 = scmp.ne.s32.totalorder %s76, %s77
      %p91 = scmp.eq.s32.totalorder %s29, 1
      %p92 = por %p90, %p91
      %p94 = scmp.ne.s32.totalorder %s77, %s93
      %p95 = scmp.eq.s32.totalorder %s29, 0
      %p96 = por %p94, %p95
      %s97 = ssub.s32 %s30, %s42
      %p98 = scmp.eq.s32.totalorder %s97, 0
      %s100 = sadd.s32 %s99, 1
      %s101 = scalar_select %p98, %s99, %s100
      %p104 = pneg %p98
      %p105 = scmp.eq.s32.totalorder %s23, 1
      %p106 = por %p104, %p105
      %p107 = scmp.ne.s32.totalorder %s99, %s102
      %p108 = scmp.eq.s32.totalorder %s23, 0
      %p109 = por %p107, %p108
      %p110 = scmp.ne.s32.totalorder %s99, %s102
      %p111 = scmp.eq.s32.totalorder %s28, 1
      %p112 = por %p110, %p111
      %p113 = scmp.ne.s32.totalorder %s102, %s103
      %p114 = scmp.eq.s32.totalorder %s28, 0
      %p115 = por %p113, %p114
      %p116 = scmp.ne.s32.totalorder %s102, %s103
      %p117 = scmp.eq.s32.totalorder %s29, 1
      %p118 = por %p116, %p117
      %p120 = scmp.ne.s32.totalorder %s103, %s119
      %p121 = scmp.eq.s32.totalorder %s29, 0
      %p122 = por %p120, %p121
      %s123 = ssub.s32 %s30, %s42
      %s124 = ssub.s32 %s31, %s38
      %s125 = sor.u32 %s123, %s124
      %p126 = scmp.eq.s32.totalorder %s125, 0
      %s128 = sadd.s32 %s127, 1
      %s129 = scalar_select %p126, %s127, %s128
      %p132 = pneg %p126
      %p133 = scmp.eq.s32.totalorder %s23, 1
      %p134 = por %p132, %p133
      %p135 = scmp.ne.s32.totalorder %s127, %s130
      %p136 = scmp.eq.s32.totalorder %s23, 0
      %p137 = por %p135, %p136
      %p138 = scmp.ne.s32.totalorder %s127, %s130
      %p139 = scmp.eq.s32.totalorder %s28, 1
      %p140 = por %p138, %p139
      %p141 = scmp.ne.s32.totalorder %s130, %s131
      %p142 = scmp.eq.s32.totalorder %s28, 0
      %p143 = por %p141, %p142
      %p144 = scmp.ne.s32.totalorder %s130, %s131
      %p145 = scmp.eq.s32.totalorder %s29, 1
      %p146 = por %p144, %p145
      %p148 = scmp.ne.s32.totalorder %s131, %s147
      %p149 = scmp.eq.s32.totalorder %s29, 0
      %p150 = por %p148, %p149
      %s151 = ssub.s32 %s30, %s42
      %s152 = ssub.s32 %s31, %s38
      %s153 = sor.u32 %s151, %s152
      %p154 = scmp.eq.s32.totalorder %s153, 0
      %s156 = sadd.s32 %s155, 1
      %s157 = scalar_select %p154, %s155, %s156
      %p160 = pneg %p154
      %p161 = scmp.eq.s32.totalorder %s23, 1
      %p162 = por %p160, %p161
      %p163 = scmp.ne.s32.totalorder %s155, %s158
      %p164 = scmp.eq.s32.totalorder %s23, 0
      %p165 = por %p163, %p164
      %p166 = scmp.ne.s32.totalorder %s155, %s158
      %p167 = scmp.eq.s32.totalorder %s28, 1
      %p168 = por %p166, %p167
      %p169 = scmp.ne.s32.totalorder %s158, %s159
      %p170 = scmp.eq.s32.totalorder %s28, 0
      %p171 = por %p169, %p170
      %p172 = scmp.ne.s32.totalorder %s158, %s159
      %p173 = scmp.eq.s32.totalorder %s29, 1
      %p174 = por %p172, %p173
      %p176 = scmp.ne.s32.totalorder %s159, %s175
      %p177 = scmp.eq.s32.totalorder %s29, 0
      %p178 = por %p176, %p177
      %p179 = scmp.le.s32.totalorder 1, %s23
      %p180 = scmp.lt.s32.totalorder %s23, 3
      %p181 = pnand %p179, %p180
      %p182 = pneg %p181
      // Predicated region
      $region9: #{tpu_custom_call.1} parent=5 // pred_check
        _
      $region10: #{tpu_custom_call.1} parent=5 // pred_check_branch
        %184 = sbr.rel (%p181) target = $region12
      $region11: #{tpu_custom_call.1} parent=5 // pred_region
        %s185 = ssub.s32 %s23, 1
      $region12: #{tpu_custom_call.1} parent=5 // pred_fallthru
        _
      %p186 = scmp.lt.s32.totalorder %s23, 2
      // Predicated region
      $region13: #{tpu_custom_call.1} parent=5 // pred_check
        %p187 = pneg %p186
      $region14: #{tpu_custom_call.1} parent=5 // pred_check_branch
        %189 = sbr.rel (%p187) target = $region16
      $region15: #{tpu_custom_call.1} parent=5 // pred_region
        // Predicated region
        $region17: #{tpu_custom_call.1} parent=15 // pred_check
          %p190 = pneg %p57
        $region18: #{tpu_custom_call.1} parent=15 // pred_check_branch
          %192 = sbr.rel (%p190) target = $region20
        $region19: #{tpu_custom_call.1} parent=15 // pred_region
          %s193 = sand.u32 %s47, 1
          %s194 = scalar_lea.sflag [#allocation3], %s193
          %s195 = sand.u32 %s47, 1
          %s196 = smul.addr %s195, 16
          %s197 = scalar_lea.vmem [#allocation2], %s196
          %s198 = smul.u32 2, %s30
          %s200 = ssub.s32 256, 256
          %201 = vsyncadd %s194, %s200
          %s202 = sadd.s32 %s31, %s198
          %s203 = smul.addr %s202, 128
          %s204 = scalar_lea.hbm %s0, %s203
          %s205 = sshll.u32 %s197, 4
          %s206 = int_to_ptr.vmem [resolvable:$true] %s205
          %211 = dma.hbm_to_vmem [thread:$0]  %s204, 256, %s206, %s194, 128, 128, 8
        $region20: #{tpu_custom_call.1} parent=15 // pred_fallthru
          _
        // Predicated region
        $region21: #{tpu_custom_call.1} parent=15 // pred_check
          %p212 = pneg %p83
        $region22: #{tpu_custom_call.1} parent=15 // pred_check_branch
          %214 = sbr.rel (%p212) target = $region24
        $region23: #{tpu_custom_call.1} parent=15 // pred_region
          %s215 = sand.u32 %s23, 1
          %s216 = scalar_lea.sflag [#allocation6], %s215
          %s217 = sand.u32 %s73, 1
          %s218 = smul.addr %s217, 16
          %s219 = scalar_lea.vmem [#allocation5], %s218
          %s220 = smul.u32 2, %s30
          %s222 = ssub.s32 256, 256
          %223 = vsyncadd %s216, %s222
          %s224 = smul.addr %s220, 128
          %s225 = scalar_lea.hbm %s1, %s224
          %s226 = sshll.u32 %s219, 4
          %s227 = int_to_ptr.vmem [resolvable:$true] %s226
          %232 = dma.hbm_to_vmem [thread:$0]  %s225, 256, %s227, %s216, 128, 128, 8
        $region24: #{tpu_custom_call.1} parent=15 // pred_fallthru
          _
        // Predicated region
        $region25: #{tpu_custom_call.1} parent=15 // pred_check
          %p233 = pneg %p109
        $region26: #{tpu_custom_call.1} parent=15 // pred_check_branch
          %235 = sbr.rel (%p233) target = $region28
        $region27: #{tpu_custom_call.1} parent=15 // pred_region
          %s236 = sand.u32 %s23, 1
          %s237 = scalar_lea.sflag [#allocation6], %s236
          %s238 = sand.u32 %s99, 1
          %s239 = smul.addr %s238, 16
          %s240 = scalar_lea.vmem [#allocation7], %s239
          %s241 = smul.u32 2, %s30
          %s243 = ssub.s32 256, 256
          %244 = vsyncadd %s237, %s243
          %s245 = smul.addr %s241, 128
          %s246 = scalar_lea.hbm %s2, %s245
          %s247 = sshll.u32 %s240, 4
          %s248 = int_to_ptr.vmem [resolvable:$true] %s247
          %253 = dma.hbm_to_vmem [thread:$0]  %s246, 256, %s248, %s237, 128, 128, 8
        $region28: #{tpu_custom_call.1} parent=15 // pred_fallthru
          _
      $region16: #{tpu_custom_call.1} parent=5 // pred_fallthru
        _
      %p254 = scmp.le.s32.totalorder 1, %s23
      %p255 = scmp.lt.s32.totalorder %s23, 3
      %p256 = pnand %p254, %p255
      %p257 = pneg %p256
      // Predicated region
      $region29: #{tpu_custom_call.1} parent=5 // pred_check
        _
      $region30: #{tpu_custom_call.1} parent=5 // pred_check_branch
        %259 = sbr.rel (%p256) target = $region32
      $region31: #{tpu_custom_call.1} parent=5 // pred_region
        %s260 = ssub.s32 %s23, 1
        %s261 = sand.u32 %s50, 1
        %s262 = scalar_lea.sflag [#allocation3], %s261
        %s263 = sand.u32 %s50, 1
        %s264 = smul.addr %s263, 16
        %s265 = scalar_lea.vmem [#allocation2], %s264
        // Predicated region
        $region33: #{tpu_custom_call.1} parent=31 // pred_check
          %p266 = pneg %p63
        $region34: #{tpu_custom_call.1} parent=31 // pred_check_branch
          %268 = sbr.rel (%p266) target = $region36
        $region35: #{tpu_custom_call.1} parent=31 // pred_region
          %269 = dma.done %s262, 256
        $region36: #{tpu_custom_call.1} parent=31 // pred_fallthru
          _
        %s270 = sand.u32 %s28, 1
        %s271 = scalar_lea.sflag [#allocation6], %s270
        %s272 = sand.u32 %s76, 1
        %s273 = smul.addr %s272, 16
        %s274 = scalar_lea.vmem [#allocation5], %s273
        // Predicated region
        $region37: #{tpu_custom_call.1} parent=31 // pred_check
          %p275 = pneg %p89
        $region38: #{tpu_custom_call.1} parent=31 // pred_check_branch
          %277 = sbr.rel (%p275) target = $region40
        $region39: #{tpu_custom_call.1} parent=31 // pred_region
          %278 = dma.done %s271, 256
        $region40: #{tpu_custom_call.1} parent=31 // pred_fallthru
          _
        %s279 = sand.u32 %s28, 1
        %s280 = scalar_lea.sflag [#allocation6], %s279
        %s281 = sand.u32 %s102, 1
        %s282 = smul.addr %s281, 16
        %s283 = scalar_lea.vmem [#allocation7], %s282
        // Predicated region
        $region41: #{tpu_custom_call.1} parent=31 // pred_check
          %p284 = pneg %p115
        $region42: #{tpu_custom_call.1} parent=31 // pred_check_branch
          %286 = sbr.rel (%p284) target = $region44
        $region43: #{tpu_custom_call.1} parent=31 // pred_region
          %287 = dma.done %s280, 256
        $region44: #{tpu_custom_call.1} parent=31 // pred_fallthru
          _
        %s288 = sand.u32 %s50, 1
        %s289 = scalar_lea.sflag [#allocation3], %s288
        %s290 = sand.u32 %s50, 1
        %s291 = smul.addr %s290, 16
        %s292 = scalar_lea.vmem [#allocation2], %s291
        %p293 = pneg %p63
        %p294 = pneg %p60
        %s295 = sand.u32 %s28, 1
        %s296 = scalar_lea.sflag [#allocation6], %s295
        %s297 = sand.u32 %s76, 1
        %s298 = smul.addr %s297, 16
        %s299 = scalar_lea.vmem [#allocation5], %s298
        %p300 = pneg %p89
        %p301 = pneg %p86
        %s302 = sand.u32 %s28, 1
        %s303 = scalar_lea.sflag [#allocation6], %s302
        %s304 = sand.u32 %s102, 1
        %s305 = smul.addr %s304, 16
        %s306 = scalar_lea.vmem [#allocation7], %s305
        %p307 = pneg %p115
        %p308 = pneg %p112
        %p309 = pneg %p143
        %p310 = pneg %p140
        %s311 = sand.u32 %s130, 1
        %s312 = scalar_lea.sflag [#allocation4], %s311
        %s313 = sand.u32 %s130, 1
        %s314 = smul.addr %s313, 16
        %s315 = scalar_lea.vmem [#allocation8], %s314
        %p316 = pneg %p171
        %p317 = pneg %p168
        %s318 = sand.u32 %s158, 1
        %s319 = scalar_lea.sflag [#allocation10], %s318
        %s320 = sand.u32 %s158, 1
        %s321 = smul.addr %s320, 16
        %s322 = scalar_lea.vmem [#allocation9], %s321
        %s323 = smul.u32 2, %s32
        %s324 = smul.u32 2, %s32
        %s325 = smul.u32 2, %s32
        %s326 = smul.u32 2, %s32
        %s327 = smul.u32 2, %s32
        %v328 = vld [vmem:[%s265] sm:$0xff]
        %v329 = vld [vmem:[%s265 + $0x8] sm:$0xff]
        %v330 = vmul.f32 %v328, 0.17677669
        %v331 = vmul.f32 %v329, 0.17677669
        %v332 = vld [vmem:[%s274] sm:$0xff]
        %v333 = vld [vmem:[%s274 + $0x8] sm:$0xff]
        %vm334 = vcmask 261120
        %v336 = vsel %vm334, %v330, 0
        %v339 = vsel %vm334, %v332, 0
        %341 = vmatprep.subr.mxu0 0.0
        %342 = vmatpush1.xpose.msra.mxu0 %v339
        %343 = vmatprep.subr.mxu0 0.0
        %344 = vmatpush1.xpose.msra.mxu0 0.0
        %345 = vmatprep.subr.mxu0 0.0
        %346 = vmatpush1.xpose.msra.mxu0 0.0
        %347 = vmatprep.subr.mxu0 0.0
        %348 = vmatpush1.xpose.msra.mxu0 0.0
        %349 = vmatprep.subr.mxu0 0.0
        %350 = vmatpush1.xpose.msra.mxu0 0.0
        %351 = vmatprep.subr.mxu0 0.0
        %352 = vmatpush1.xpose.msra.mxu0 0.0
        %353 = vmatprep.subr.mxu0 0.0
        %354 = vmatpush1.xpose.msra.mxu0 0.0
        %355 = vmatprep.subr.mxu0 0.0
        %356 = vmatpush1.xpose.msra.mxu0 0.0
        %357 = vmatprep.subr.mxu0 0.0
        %358 = vmatpush1.xpose.msra.mxu0 0.0
        %359 = vmatprep.subr.mxu0 0.0
        %360 = vmatpush1.xpose.msra.mxu0 0.0
        %361 = vmatprep.subr.mxu0 0.0
        %362 = vmatpush1.xpose.msra.mxu0 0.0
        %363 = vmatprep.subr.mxu0 0.0
        %364 = vmatpush1.xpose.msra.mxu0 0.0
        %365 = vmatprep.subr.mxu0 0.0
        %366 = vmatpush1.xpose.msra.mxu0 0.0
        %367 = vmatprep.subr.mxu0 0.0
        %368 = vmatpush1.xpose.msra.mxu0 0.0
        %369 = vmatprep.subr.mxu0 0.0
        %370 = vmatpush1.xpose.msra.mxu0 0.0
        %371 = vmatprep.subr.mxu0 0.0
        %372 = vmatpush1.xpose.msra.mxu0 0.0
        %373 = vmatprep.subr.mxu0 0.0
        %374 = vmatpush1.xpose.msra.mxu0 0.0
        %375 = vmatprep.subr.mxu0 0.0
        %376 = vmatpush1.xpose.msra.mxu0 0.0
        %377 = vmatprep.subr.mxu0 0.0
        %378 = vmatpush1.xpose.msra.mxu0 0.0
        %379 = vmatprep.subr.mxu0 0.0
        %380 = vmatpush1.xpose.msra.mxu0 0.0
        %381 = vmatprep.subr.mxu0 0.0
        %382 = vmatpush1.xpose.msra.mxu0 0.0
        %383 = vmatprep.subr.mxu0 0.0
        %384 = vmatpush1.xpose.msra.mxu0 0.0
        %385 = vmatprep.subr.mxu0 0.0
        %386 = vmatpush1.xpose.msra.mxu0 0.0
        %387 = vmatprep.subr.mxu0 0.0
        %388 = vmatpush1.xpose.msra.mxu0 0.0
        %389 = vmatprep.subr.mxu0 0.0
        %390 = vmatpush1.xpose.msra.mxu0 0.0
        %391 = vmatprep.subr.mxu0 0.0
        %392 = vmatpush1.xpose.msra.mxu0 0.0
        %393 = vmatprep.subr.mxu0 0.0
        %394 = vmatpush1.xpose.msra.mxu0 0.0
        %395 = vmatprep.subr.mxu0 0.0
        %396 = vmatpush1.xpose.msra.mxu0 0.0
        %397 = vmatprep.subr.mxu0 0.0
        %398 = vmatpush1.xpose.msra.mxu0 0.0
        %399 = vmatprep.subr.mxu0 0.0
        %400 = vmatpush1.xpose.msra.mxu0 0.0
        %401 = vmatprep.subr.mxu0 0.0
        %402 = vmatpush1.xpose.msra.mxu0 0.0
        %403 = vmatprep.subr.mxu0 0.0
        %404 = vmatpush1.xpose.msra.mxu0 0.0
        %405 = vmatprep.mubr.f32.mxu0 0.0
        %406 = vmatmul.mubr.f32.gmra.mrb[0].mxu0 %v336
        %v407 = vpop.f32.mrb[0].mxu0
        %v408 = vadd.f32 0.0, %v407
        %v409 = vpop.f32.mrb[0].mxu0
        %410 = vdwg.mxu0
        %v412 = vsel %vm334, %v331, 0
        %v415 = vsel %vm334, %v333, 0
        %417 = vmatprep.subr.mxu0 0.0
        %418 = vmatpush1.xpose.msra.mxu0 %v415
        %419 = vmatprep.subr.mxu0 0.0
        %420 = vmatpush1.xpose.msra.mxu0 0.0
        %421 = vmatprep.subr.mxu0 0.0
        %422 = vmatpush1.xpose.msra.mxu0 0.0
        %423 = vmatprep.subr.mxu0 0.0
        %424 = vmatpush1.xpose.msra.mxu0 0.0
        %425 = vmatprep.subr.mxu0 0.0
        %426 = vmatpush1.xpose.msra.mxu0 0.0
        %427 = vmatprep.subr.mxu0 0.0
        %428 = vmatpush1.xpose.msra.mxu0 0.0
        %429 = vmatprep.subr.mxu0 0.0
        %430 = vmatpush1.xpose.msra.mxu0 0.0
        %431 = vmatprep.subr.mxu0 0.0
        %432 = vmatpush1.xpose.msra.mxu0 0.0
        %433 = vmatprep.subr.mxu0 0.0
        %434 = vmatpush1.xpose.msra.mxu0 0.0
        %435 = vmatprep.subr.mxu0 0.0
        %436 = vmatpush1.xpose.msra.mxu0 0.0
        %437 = vmatprep.subr.mxu0 0.0
        %438 = vmatpush1.xpose.msra.mxu0 0.0
        %439 = vmatprep.subr.mxu0 0.0
        %440 = vmatpush1.xpose.msra.mxu0 0.0
        %441 = vmatprep.subr.mxu0 0.0
        %442 = vmatpush1.xpose.msra.mxu0 0.0
        %443 = vmatprep.subr.mxu0 0.0
        %444 = vmatpush1.xpose.msra.mxu0 0.0
        %445 = vmatprep.subr.mxu0 0.0
        %446 = vmatpush1.xpose.msra.mxu0 0.0
        %447 = vmatprep.subr.mxu0 0.0
        %448 = vmatpush1.xpose.msra.mxu0 0.0
        %449 = vmatprep.subr.mxu0 0.0
        %450 = vmatpush1.xpose.msra.mxu0 0.0
        %451 = vmatprep.subr.mxu0 0.0
        %452 = vmatpush1.xpose.msra.mxu0 0.0
        %453 = vmatprep.subr.mxu0 0.0
        %454 = vmatpush1.xpose.msra.mxu0 0.0
        %455 = vmatprep.subr.mxu0 0.0
        %456 = vmatpush1.xpose.msra.mxu0 0.0
        %457 = vmatprep.subr.mxu0 0.0
        %458 = vmatpush1.xpose.msra.mxu0 0.0
        %459 = vmatprep.subr.mxu0 0.0
        %460 = vmatpush1.xpose.msra.mxu0 0.0
        %461 = vmatprep.subr.mxu0 0.0
        %462 = vmatpush1.xpose.msra.mxu0 0.0
        %463 = vmatprep.subr.mxu0 0.0
        %464 = vmatpush1.xpose.msra.mxu0 0.0
        %465 = vmatprep.subr.mxu0 0.0
        %466 = vmatpush1.xpose.msra.mxu0 0.0
        %467 = vmatprep.subr.mxu0 0.0
        %468 = vmatpush1.xpose.msra.mxu0 0.0
        %469 = vmatprep.subr.mxu0 0.0
        %470 = vmatpush1.xpose.msra.mxu0 0.0
        %471 = vmatprep.subr.mxu0 0.0
        %472 = vmatpush1.xpose.msra.mxu0 0.0
        %473 = vmatprep.subr.mxu0 0.0
        %474 = vmatpush1.xpose.msra.mxu0 0.0
        %475 = vmatprep.subr.mxu0 0.0
        %476 = vmatpush1.xpose.msra.mxu0 0.0
        %477 = vmatprep.subr.mxu0 0.0
        %478 = vmatpush1.xpose.msra.mxu0 0.0
        %479 = vmatprep.subr.mxu0 0.0
        %480 = vmatpush1.xpose.msra.mxu0 0.0
        %481 = vmatprep.mubr.f32.mxu0 0.0
        %482 = vmatmul.mubr.f32.gmra.mrb[0].mxu0 %v412
        %v483 = vpop.f32.mrb[0].mxu0
        %v484 = vadd.f32 0.0, %v483
        %v485 = vpop.f32.mrb[0].mxu0
        %486 = vdwg.mxu0
        %vm487 = vcmask 64512
        %v488 = vsel %vm487, %v408, -inf
        %489 = vmax.xlane.f32.xlu0 %v488
        %v490 = vpop.xlane.xlu0 %489
        %v491 = vsel %vm487, %v484, -inf
        %492 = vmax.xlane.f32.xlu0 %v491
        %v493 = vpop.xlane.xlu0 %492
        %v494 = vsub.f32 %v408, %v490
        %v495 = vsub.f32 %v484, %v493
        %v496 = vmul.f32 %v494, 1.442695
        %v497 = vpow.pop %v496
        %v498 = vmul.f32 %v495, 1.442695
        %v499 = vpow.pop %v498
        %v500 = vsel %vm487, %v497, 0.0
        %501 = vadd.xlane.f32.xlu0 %v500
        %v502 = vpop.xlane.xlu0 %501
        %v503 = vsel %vm487, %v499, 0.0
        %504 = vadd.xlane.f32.xlu0 %v503
        %v505 = vpop.xlane.xlu0 %504
        %v506 = vrcp.pop %v502
        %v507 = vrcp.pop %v505
        %v508 = vmul.f32 %v497, %v506
        %v509 = vmul.f32 %v499, %v507
        %v510 = vld [vmem:[%s283] sm:$0xff]
        %v511 = vld [vmem:[%s283 + $0x8] sm:$0xff]
        %v513 = vsel %vm487, %v508, 0
        %515 = vmatprep.subr.mxu0 0.0
        %516 = vmatpush1.msra.mxu0 %v510
        %517 = vmatprep.subr.mxu0 0.0
        %518 = vmatpush1.msra.mxu0 0.0
        %519 = vmatprep.subr.mxu0 0.0
        %520 = vmatpush1.msra.mxu0 0.0
        %521 = vmatprep.subr.mxu0 0.0
        %522 = vmatpush1.msra.mxu0 0.0
        %523 = vmatprep.subr.mxu0 0.0
        %524 = vmatpush1.msra.mxu0 0.0
        %525 = vmatprep.subr.mxu0 0.0
        %526 = vmatpush1.msra.mxu0 0.0
        %527 = vmatprep.subr.mxu0 0.0
        %528 = vmatpush1.msra.mxu0 0.0
        %529 = vmatprep.subr.mxu0 0.0
        %530 = vmatpush1.msra.mxu0 0.0
        %531 = vmatprep.subr.mxu0 0.0
        %532 = vmatpush1.msra.mxu0 0.0
        %533 = vmatprep.subr.mxu0 0.0
        %534 = vmatpush1.msra.mxu0 0.0
        %535 = vmatprep.subr.mxu0 0.0
        %536 = vmatpush1.msra.mxu0 0.0
        %537 = vmatprep.subr.mxu0 0.0
        %538 = vmatpush1.msra.mxu0 0.0
        %539 = vmatprep.subr.mxu0 0.0
        %540 = vmatpush1.msra.mxu0 0.0
        %541 = vmatprep.subr.mxu0 0.0
        %542 = vmatpush1.msra.mxu0 0.0
        %543 = vmatprep.subr.mxu0 0.0
        %544 = vmatpush1.msra.mxu0 0.0
        %545 = vmatprep.subr.mxu0 0.0
        %546 = vmatpush1.msra.mxu0 0.0
        %547 = vmatprep.subr.mxu0 0.0
        %548 = vmatpush1.msra.mxu0 0.0
        %549 = vmatprep.subr.mxu0 0.0
        %550 = vmatpush1.msra.mxu0 0.0
        %551 = vmatprep.subr.mxu0 0.0
        %552 = vmatpush1.msra.mxu0 0.0
        %553 = vmatprep.subr.mxu0 0.0
        %554 = vmatpush1.msra.mxu0 0.0
        %555 = vmatprep.subr.mxu0 0.0
        %556 = vmatpush1.msra.mxu0 0.0
        %557 = vmatprep.subr.mxu0 0.0
        %558 = vmatpush1.msra.mxu0 0.0
        %559 = vmatprep.subr.mxu0 0.0
        %560 = vmatpush1.msra.mxu0 0.0
        %561 = vmatprep.subr.mxu0 0.0
        %562 = vmatpush1.msra.mxu0 0.0
        %563 = vmatprep.subr.mxu0 0.0
        %564 = vmatpush1.msra.mxu0 0.0
        %565 = vmatprep.subr.mxu0 0.0
        %566 = vmatpush1.msra.mxu0 0.0
        %567 = vmatprep.subr.mxu0 0.0
        %568 = vmatpush1.msra.mxu0 0.0
        %569 = vmatprep.subr.mxu0 0.0
        %570 = vmatpush1.msra.mxu0 0.0
        %571 = vmatprep.subr.mxu0 0.0
        %572 = vmatpush1.msra.mxu0 0.0
        %573 = vmatprep.subr.mxu0 0.0
        %574 = vmatpush1.msra.mxu0 0.0
        %575 = vmatprep.subr.mxu0 0.0
        %576 = vmatpush1.msra.mxu0 0.0
        %577 = vmatprep.subr.mxu0 0.0
        %578 = vmatpush1.msra.mxu0 0.0
        %579 = vmatprep.mubr.f32.mxu0 0.0
        %580 = vmatmul.mubr.f32.gmra.mrb[0].mxu0 %v513
        %v581 = vpop.f32.mrb[0].mxu0
        %v582 = vadd.f32 0.0, %v581
        %v583 = vpop.f32.mrb[0].mxu0
        %584 = vdwg.mxu0
        %v586 = vsel %vm487, %v509, 0
        %588 = vmatprep.subr.mxu0 0.0
        %589 = vmatpush1.msra.mxu0 %v511
        %590 = vmatprep.subr.mxu0 0.0
        %591 = vmatpush1.msra.mxu0 0.0
        %592 = vmatprep.subr.mxu0 0.0
        %593 = vmatpush1.msra.mxu0 0.0
        %594 = vmatprep.subr.mxu0 0.0
        %595 = vmatpush1.msra.mxu0 0.0
        %596 = vmatprep.subr.mxu0 0.0
        %597 = vmatpush1.msra.mxu0 0.0
        %598 = vmatprep.subr.mxu0 0.0
        %599 = vmatpush1.msra.mxu0 0.0
        %600 = vmatprep.subr.mxu0 0.0
        %601 = vmatpush1.msra.mxu0 0.0
        %602 = vmatprep.subr.mxu0 0.0
        %603 = vmatpush1.msra.mxu0 0.0
        %604 = vmatprep.subr.mxu0 0.0
        %605 = vmatpush1.msra.mxu0 0.0
        %606 = vmatprep.subr.mxu0 0.0
        %607 = vmatpush1.msra.mxu0 0.0
        %608 = vmatprep.subr.mxu0 0.0
        %609 = vmatpush1.msra.mxu0 0.0
        %610 = vmatprep.subr.mxu0 0.0
        %611 = vmatpush1.msra.mxu0 0.0
        %612 = vmatprep.subr.mxu0 0.0
        %613 = vmatpush1.msra.mxu0 0.0
        %614 = vmatprep.subr.mxu0 0.0
        %615 = vmatpush1.msra.mxu0 0.0
        %616 = vmatprep.subr.mxu0 0.0
        %617 = vmatpush1.msra.mxu0 0.0
        %618 = vmatprep.subr.mxu0 0.0
        %619 = vmatpush1.msra.mxu0 0.0
        %620 = vmatprep.subr.mxu0 0.0
        %621 = vmatpush1.msra.mxu0 0.0
        %622 = vmatprep.subr.mxu0 0.0
        %623 = vmatpush1.msra.mxu0 0.0
        %624 = vmatprep.subr.mxu0 0.0
        %625 = vmatpush1.msra.mxu0 0.0
        %626 = vmatprep.subr.mxu0 0.0
        %627 = vmatpush1.msra.mxu0 0.0
        %628 = vmatprep.subr.mxu0 0.0
        %629 = vmatpush1.msra.mxu0 0.0
        %630 = vmatprep.subr.mxu0 0.0
        %631 = vmatpush1.msra.mxu0 0.0
        %632 = vmatprep.subr.mxu0 0.0
        %633 = vmatpush1.msra.mxu0 0.0
        %634 = vmatprep.subr.mxu0 0.0
        %635 = vmatpush1.msra.mxu0 0.0
        %636 = vmatprep.subr.mxu0 0.0
        %637 = vmatpush1.msra.mxu0 0.0
        %638 = vmatprep.subr.mxu0 0.0
        %639 = vmatpush1.msra.mxu0 0.0
        %640 = vmatprep.subr.mxu0 0.0
        %641 = vmatpush1.msra.mxu0 0.0
        %642 = vmatprep.subr.mxu0 0.0
        %643 = vmatpush1.msra.mxu0 0.0
        %644 = vmatprep.subr.mxu0 0.0
        %645 = vmatpush1.msra.mxu0 0.0
        %646 = vmatprep.subr.mxu0 0.0
        %647 = vmatpush1.msra.mxu0 0.0
        %648 = vmatprep.subr.mxu0 0.0
        %649 = vmatpush1.msra.mxu0 0.0
        %650 = vmatprep.subr.mxu0 0.0
        %651 = vmatpush1.msra.mxu0 0.0
        %652 = vmatprep.mubr.f32.mxu0 0.0
        %653 = vmatmul.mubr.f32.gmra.mrb[0].mxu0 %v586
        %v654 = vpop.f32.mrb[0].mxu0
        %v655 = vadd.f32 0.0, %v654
        %v656 = vpop.f32.mrb[0].mxu0
        %657 = vdwg.mxu0
        %658 = vst.msk [vmem:[%s315] sm:$0xff] %vm334, %v582
        %659 = vst.msk [vmem:[%s315 + $0x8] sm:$0xff] %vm334, %v655
        %660 = vst.msk [vmem:[%s322] sm:$0xff] %vm487, %v508
        %661 = vst.msk [vmem:[%s322 + $0x8] sm:$0xff] %vm487, %v509
        %s662 = sand.u32 %s130, 1
        %s663 = scalar_lea.sflag [#allocation4], %s662
        %s664 = sand.u32 %s130, 1
        %s665 = smul.addr %s664, 16
        %s666 = scalar_lea.vmem [#allocation8], %s665
        %s667 = sand.u32 %s158, 1
        %s668 = scalar_lea.sflag [#allocation10], %s667
        %s669 = sand.u32 %s158, 1
        %s670 = smul.addr %s669, 16
        %s671 = scalar_lea.vmem [#allocation9], %s670
        // Predicated region
        $region45: #{tpu_custom_call.1} parent=31 // pred_check
          %p672 = pneg %p140
        $region46: #{tpu_custom_call.1} parent=31 // pred_check_branch
          %674 = sbr.rel (%p672) target = $region48
        $region47: #{tpu_custom_call.1} parent=31 // pred_region
          %s675 = smul.u32 2, %s32
          %s677 = ssub.s32 256, 256
          %678 = vsyncadd %s663, %s677
          %s679 = sadd.s32 %s33, %s675
          %s680 = smul.addr %s679, 128
          %s681 = scalar_lea.hbm %s3, %s680
          %s682 = sshll.u32 %s666, 4
          %s683 = int_to_ptr.vmem [resolvable:$true] %s682
          %688 = dma.vmem_to_hbm [thread:$0]  %s683, 256, %s681, %s663, 128, 128, 8
        $region48: #{tpu_custom_call.1} parent=31 // pred_fallthru
          _
        // Predicated region
        $region49: #{tpu_custom_call.1} parent=31 // pred_check
          %p689 = pneg %p168
        $region50: #{tpu_custom_call.1} parent=31 // pred_check_branch
          %691 = sbr.rel (%p689) target = $region52
        $region51: #{tpu_custom_call.1} parent=31 // pred_region
          %s692 = smul.u32 2, %s32
          %s694 = ssub.s32 256, 256
          %695 = vsyncadd %s668, %s694
          %s696 = sadd.s32 %s33, %s692
          %s697 = smul.addr %s696, 128
          %s698 = scalar_lea.hbm %s4, %s697
          %s699 = sshll.u32 %s671, 4
          %s700 = int_to_ptr.vmem [resolvable:$true] %s699
          %705 = dma.vmem_to_hbm [thread:$0]  %s700, 256, %s698, %s668, 128, 128, 8
        $region52: #{tpu_custom_call.1} parent=31 // pred_fallthru
          _
      $region32: #{tpu_custom_call.1} parent=5 // pred_fallthru
        _
      %p706 = scmp.le.s32.totalorder 2, %s23
      // Predicated region
      $region53: #{tpu_custom_call.1} parent=5 // pred_check
        %p707 = pneg %p706
      $region54: #{tpu_custom_call.1} parent=5 // pred_check_branch
        %709 = sbr.rel (%p707) target = $region56
      $region55: #{tpu_custom_call.1} parent=5 // pred_region
        %s710 = ssub.s32 %s23, 2
        // Predicated region
        $region57: #{tpu_custom_call.1} parent=55 // pred_check
          %p711 = pneg %p146
        $region58: #{tpu_custom_call.1} parent=55 // pred_check_branch
          %713 = sbr.rel (%p711) target = $region60
        $region59: #{tpu_custom_call.1} parent=55 // pred_region
          %s714 = sand.u32 %s131, 1
          %s715 = scalar_lea.sflag [#allocation4], %s714
          %s716 = sand.u32 %s131, 1
          %s717 = smul.addr %s716, 16
          %s718 = scalar_lea.vmem [#allocation8], %s717
          %719 = dma.done %s715, 256
        $region60: #{tpu_custom_call.1} parent=55 // pred_fallthru
          _
        // Predicated region
        $region61: #{tpu_custom_call.1} parent=55 // pred_check
          %p720 = pneg %p174
        $region62: #{tpu_custom_call.1} parent=55 // pred_check_branch
          %722 = sbr.rel (%p720) target = $region64
        $region63: #{tpu_custom_call.1} parent=55 // pred_region
          %s723 = sand.u32 %s159, 1
          %s724 = scalar_lea.sflag [#allocation10], %s723
          %s725 = sand.u32 %s159, 1
          %s726 = smul.addr %s725, 16
          %s727 = scalar_lea.vmem [#allocation9], %s726
          %728 = dma.done %s724, 256
        $region64: #{tpu_custom_call.1} parent=55 // pred_fallthru
          _
      $region56: #{tpu_custom_call.1} parent=5 // pred_fallthru
        _
    $region6: #{tpu_custom_call.1} parent=1 // loop_footer
      %s27 = sadd.s32 1, %s23
    $region7: #{tpu_custom_call.1} parent=1 // loop_footer_branch
      %22 = sbr.rel target = $region3
    $region8: #{tpu_custom_call.1} parent=1 // loop_exit
      _
    %729 = vsyncpa [#allocation3], 1
    %s730 = scalar_lea.sflag [#allocation3], 1
    %731 = vsyncpa %s730, 1
    %732 = vsyncpa [#allocation6], 1
    %s733 = scalar_lea.sflag [#allocation6], 1
    %734 = vsyncpa %s733, 1
    %735 = vsyncpa [#allocation4], 1
    %s736 = scalar_lea.sflag [#allocation4], 1
    %737 = vsyncpa %s736, 1
    %738 = vsyncpa [#allocation10], 1
    %s739 = scalar_lea.sflag [#allocation10], 1
    %740 = vsyncpa %s739, 1

</llo_original>
